<compile_context>
chip_gen: v7x
topology: tpu7x:2x2x1
jax: 0.10.0
libtpu: 0.0.40
codegen_flags: <defaults>
</compile_context>

<pallas_src>
import jax
import jax.numpy as jnp
from jax.experimental import pallas as pl
from jax.experimental.pallas import tpu as pltpu

_MAX_TILE = 4096  # lanes per grid step; (1, 4096) f32 tile = 16 KiB


def _comparative_score_kernel(p_ref, q_ref, dia_ref, psum_ref):
    """Elementwise calc + log partial-sum on one (1, tile) lane block.

    Padded lanes hold 1.0 (set in the wrapper), so dia == 1 and log(dia) == 0
    there: no validity masking is needed anywhere in the kernel.
    """
    p = p_ref[...]                       # (1, T) f32
    q = q_ref[...]                       # (1, T) f32

    # --- calc(p, q): abstract in the reference; ratio q / p chosen here -----
    # (exact divide kept for bit-near parity with the pure-JAX reference;
    #  q * pl.reciprocal(p, approx=True) is a cheaper EUP variant if desired)
    dia = q / p
    # -------------------------------------------------------------------------
    dia_ref[...] = dia

    # Mean path: single EUP log per element, reusing dia (matches reference
    # semantics log(calc(p, q)) for any calc).
    s = jnp.sum(jnp.log(dia), axis=1, keepdims=True)        # (1, 1) lane reduce
    # Lane-dense 128-wide store of the per-tile partial sum (no <128 stores).
    psum_ref[...] = jnp.broadcast_to(s, psum_ref.shape)


@jax.jit
def _forward_device(probs):
    """Device-side part: gather p/q, run the Pallas kernel, combine partials."""
    probs = probs.astype(jnp.float32)
    n, m = probs.shape
    slen = n - 1

    # O(slen) extraction instead of shipping the dense (n, m) matrix.
    p = probs[0, :slen]
    q = probs[jnp.arange(1, slen + 1), jnp.arange(slen)]     # probs[i+1, i]

    tile = min(((slen + 127) // 128) * 128, _MAX_TILE)
    num_tiles = pl.cdiv(slen, tile)
    c = num_tiles * tile
    pad = c - slen

    # Tiny O(slen) lane pad with the neutral value 1.0 -> mask-free kernel.
    p2 = jnp.pad(p, (0, pad), constant_values=1.0).reshape(1, c)
    q2 = jnp.pad(q, (0, pad), constant_values=1.0).reshape(1, c)

    dia, psum = pl.pallas_call(
        _comparative_score_kernel,
        out_shape=(
            jax.ShapeDtypeStruct((1, c), jnp.float32),
            jax.ShapeDtypeStruct((1, num_tiles * 128), jnp.float32),
        ),
        grid=(num_tiles,),
        in_specs=[
            pl.BlockSpec((1, tile), lambda j: (0, j)),
            pl.BlockSpec((1, tile), lambda j: (0, j)),
        ],
        out_specs=(
            pl.BlockSpec((1, tile), lambda j: (0, j)),
            pl.BlockSpec((1, 128), lambda j: (0, j)),
        ),
        compiler_params=pltpu.CompilerParams(
            dimension_semantics=("parallel",)),
    )(p2, q2)

    # Final tiny combine in XLA: one partial per tile (lane 0 of each block).
    prob = jnp.sum(psum.reshape(num_tiles, 128)[:, 0]) / jnp.float32(slen)
    return prob, dia[0, :slen]


def comparative_score(probs, return_all=False):
    """JAX/Pallas equivalent of ComparativeScoringMethod.forward."""
    probs = jnp.asarray(probs, jnp.float32)
    if probs.ndim != 2:
        raise ValueError("probs must be 2-D")
    n, m = probs.shape
    slen = n - 1
    if slen < 1:
        raise ValueError("probs must have at least 2 rows")
    if m < slen:
        raise ValueError(f"probs needs >= slen={slen} columns, got {m}")

    prob_dev, dia_dev = jax.block_until_ready(_forward_device(probs))
    prob_host, dia_host = jax.device_get((prob_dev, dia_dev))   # single transfer

    prob_scalar = float(prob_host)                 # mirrors torch .item()
    if return_all:
        return prob_scalar, dia_host.tolist()      # mirrors dia.tolist() (pre-log)
    return prob_scalar


def _reference(probs, return_all=False):
    """Pure-JAX reference for correctness check."""
    probs = jnp.asarray(probs, jnp.float32)
    slen = probs.shape[0] - 1
    p = probs[0, :slen]
    q = probs[jnp.arange(1, slen + 1), jnp.arange(slen)]
    dia = q / p                                    # same calc as the kernel
    prob = float(jnp.mean(jnp.log(dia)))
    if return_all:
        return prob, [float(v) for v in dia]
    return prob


if __name__ == "__main__":
    key = jax.random.PRNGKey(0)

    # Case 1: tiny shape straight from the module's forward (slen = 8).
    slen = 8
    k1, k2 = jax.random.split(key)
    probs_a = jax.random.uniform(
        k1, (slen + 1, slen), dtype=jnp.float32, minval=0.05, maxval=1.0)

    prob, dia_list = comparative_score(probs_a, return_all=True)
    ref_prob, ref_dia = _reference(probs_a, return_all=True)
    assert abs(prob - ref_prob) < 1e-4, (prob, ref_prob)
    assert len(dia_list) == len(ref_dia)
    assert all(abs(a - b) < 1e-4 for a, b in zip(dia_list, ref_dia))

    # Case 2: m > slen and non-128-aligned slen (exercises gather + lane pad).
    slen_b = 200
    probs_b = jax.random.uniform(
        k2, (slen_b + 1, 256), dtype=jnp.float32, minval=0.05, maxval=1.0)

    prob_b = comparative_score(probs_b, return_all=False)
    ref_b = _reference(probs_b, return_all=False)
    assert abs(prob_b - ref_b) < 1e-4, (prob_b, ref_b)

    print("KERNEL_OK")
</pallas_src>

<mosaic_0001>
module attributes {stable_mosaic.version = 11 : i64} {
  func.func @_comparative_score_kernel(%arg0: i32, %arg1: memref<1x128xf32, #tpu.memory_space<vmem>>, %arg2: memref<1x128xf32, #tpu.memory_space<vmem>>, %arg3: memref<1x128xf32, #tpu.memory_space<vmem>>, %arg4: memref<1x128xf32, #tpu.memory_space<vmem>>) attributes {dimension_semantics = [#tpu.dimension_semantics<parallel>], iteration_bounds = array<i64: 1>, scalar_prefetch = 0 : i64, scratch_operands = 0 : i64, tpu.core_type = #tpu.core_type<tc>, window_params = [{transform_indices = @transform_0, window_bounds = array<i64: 1, 128>}, {transform_indices = @transform_1, window_bounds = array<i64: 1, 128>}, {transform_indices = @transform_2, window_bounds = array<i64: 1, 128>}, {transform_indices = @transform_3, window_bounds = array<i64: 1, 128>}]} {
    %c0 = arith.constant 0 : index
    %c0_0 = arith.constant 0 : index
    %0 = vector.load %arg1[%c0, %c0_0] : memref<1x128xf32, #tpu.memory_space<vmem>>, vector<1x128xf32>
    %c0_1 = arith.constant 0 : index
    %c0_2 = arith.constant 0 : index
    %1 = vector.load %arg2[%c0_1, %c0_2] : memref<1x128xf32, #tpu.memory_space<vmem>>, vector<1x128xf32>
    %2 = arith.divf %1, %0 : vector<1x128xf32>
    %c0_3 = arith.constant 0 : index
    %c0_4 = arith.constant 0 : index
    %3 = vector.load %arg3[%c0_3, %c0_4] : memref<1x128xf32, #tpu.memory_space<vmem>>, vector<1x128xf32>
    tpu.vector_store %arg3[%c0_3, %c0_4], %2 {strides = array<i32>} : memref<1x128xf32, #tpu.memory_space<vmem>>, vector<1x128xf32>,
    %4 = math.log %2 : vector<1x128xf32>
    %cst = arith.constant dense<0.000000e+00> : vector<1xf32>
    %5 = vector.multi_reduction <add>, %4, %cst [1] : vector<1x128xf32> to vector<1xf32>
    %6 = vector.shape_cast %5 : vector<1xf32> to vector<1x1xf32>
    %7 = vector.shape_cast %6 : vector<1x1xf32> to vector<1x1xf32>
    %8 = vector.broadcast %7 : vector<1x1xf32> to vector<1x128xf32>
    %c0_5 = arith.constant 0 : index
    %c0_6 = arith.constant 0 : index
    %9 = vector.load %arg4[%c0_5, %c0_6] : memref<1x128xf32, #tpu.memory_space<vmem>>, vector<1x128xf32>
    tpu.vector_store %arg4[%c0_5, %c0_6], %8 {strides = array<i32>} : memref<1x128xf32, #tpu.memory_space<vmem>>, vector<1x128xf32>,
    return
  }
  func.func @transform_0(%arg0: i32) -> (i32, i32) {
    %c0_i32 = arith.constant 0 : i32
    %c0_i32_0 = arith.constant 0 : i32
    return %c0_i32, %arg0 : i32, i32
  }
  func.func @transform_1(%arg0: i32) -> (i32, i32) {
    %c0_i32 = arith.constant 0 : i32
    %c0_i32_0 = arith.constant 0 : i32
    return %c0_i32, %arg0 : i32, i32
  }
  func.func @transform_2(%arg0: i32) -> (i32, i32) {
    %c0_i32 = arith.constant 0 : i32
    %c0_i32_0 = arith.constant 0 : i32
    return %c0_i32, %arg0 : i32, i32
  }
  func.func @transform_3(%arg0: i32) -> (i32, i32) {
    %c0_i32 = arith.constant 0 : i32
    %c0_i32_0 = arith.constant 0 : i32
    return %c0_i32, %arg0 : i32, i32
  }
}

</mosaic_0001>

<llo_original>
// kernel: _forward_device.1
$region0: #{_forward_device.1}
  #allocation0 [shape = 'u32[]', space=smem, size = 0x4, offset = 0x4, fixed_abs, tag = 'smem constant byte address 0x4 - core index']
  #allocation1 [shape = 'u32[144,128]{1,0:T(1,128)}', space=vmem, size = 0x12000, scoped, tag = 'internal scratch']
  %s0 = inlined_call_operand.vmem [shape: f32[1,128], index: 0, kind: input, shape index: {}]
  %s1 = inlined_call_operand.vmem [shape: f32[1,128], index: 1, kind: input, shape index: {}]
  %s2 = inlined_call_operand.vmem [shape: f32[1,128], index: 2, kind: output, shape index: {0}]
  %s3 = inlined_call_operand.vmem [shape: f32[1,128], index: 3, kind: output, shape index: {1}]
  %4 = xla_tuple %s2, %s3
  %s5 = sld [smem:[#allocation0]]
  $region26: #{_forward_device.1} parent=0
    _
  %s7 = ssub.s32 1, %s5
  %s8 = scalar_select 0, %s7, %s5
  // Predicated region
  $region2: #{_forward_device.1} parent=0 // pred_check
    _
  $region3: #{_forward_device.1} parent=0 // pred_check_branch
    %10 = sbr.rel (0) target = $region5
  $region4: #{_forward_device.1} parent=0 // pred_region
    _
  $region5: #{_forward_device.1} parent=0 // pred_fallthru
    _
  // Predicated region
  $region6: #{_forward_device.1} parent=0 // pred_check
    _
  $region7: #{_forward_device.1} parent=0 // pred_check_branch
    %12 = sbr.rel (0) target = $region9
  $region8: #{_forward_device.1} parent=0 // pred_region
    _
  $region9: #{_forward_device.1} parent=0 // pred_fallthru
    _
  %v13 = vld [vmem:[%s0] sm:$0x1]
  %v14 = vld [vmem:[%s1] sm:$0x1]
  %v15 = vrcp.pop %v13
  %v16 = vmul.f32 %v14, %v15
  %17 = vst [vmem:[%s2] sm:$0x1] %v16
  %v18 = vlog2.pop %v16
  %v19 = vmul.f32 %v18, 0.6931472
  %vm20 = vcmask 1040384
  %v21 = vsel %vm20, %v19, 0.0
  %22 = vadd.xlane.f32.xlu0 %v21
  %v23 = vpop.xlane.xlu0 %22
  %24 = vst [vmem:[%s3] sm:$0x1] %v23
  // Predicated region
  $region10: #{_forward_device.1} parent=0 // pred_check
    _
  $region11: #{_forward_device.1} parent=0 // pred_check_branch
    %26 = sbr.rel (0) target = $region13
  $region12: #{_forward_device.1} parent=0 // pred_region
    _
  $region13: #{_forward_device.1} parent=0 // pred_fallthru
    _
  // Predicated region
  $region14: #{_forward_device.1} parent=0 // pred_check
    _
  $region15: #{_forward_device.1} parent=0 // pred_check_branch
    %28 = sbr.rel (0) target = $region17
  $region16: #{_forward_device.1} parent=0 // pred_region
    _
  $region17: #{_forward_device.1} parent=0 // pred_fallthru
    _
  // Predicated region
  $region18: #{_forward_device.1} parent=0 // pred_check
    _
  $region19: #{_forward_device.1} parent=0 // pred_check_branch
    %30 = sbr.rel (0) target = $region21
  $region20: #{_forward_device.1} parent=0 // pred_region
    _
  $region21: #{_forward_device.1} parent=0 // pred_fallthru
    _
  // Predicated region
  $region22: #{_forward_device.1} parent=0 // pred_check
    _
  $region23: #{_forward_device.1} parent=0 // pred_check_branch
    %32 = sbr.rel (0) target = $region25
  $region24: #{_forward_device.1} parent=0 // pred_region
    _
  $region25: #{_forward_device.1} parent=0 // pred_fallthru
    _

</llo_original>
